<compile_context>
chip_gen: v6e
topology: v6e:2x2x1
jax: 0.10.0
libtpu: 0.0.40
codegen_flags: <defaults>
</compile_context>

<pallas_src>
import functools

import jax
import jax.numpy as jnp
from jax.experimental import pallas as pl
from jax.experimental.pallas import tpu as pltpu


_LANE = 128
_BF16_SUBLANE = 16


def _round_up(x, m):
    return ((x + m - 1) // m) * m


def _pad2(a, shape):
    """Zero-pad a 2-D array up to `shape`."""
    return jnp.pad(a, [(0, s - d) for d, s in zip(a.shape, shape)])


# ---------------------------------------------------------------------------
# Fused Pallas kernel
# ---------------------------------------------------------------------------

def _fused_forward_kernel(x_hbm, adj_ref, wcat_ref, brel_ref, pool_ref,
                          invc_ref, wout_ref, bout_ref, o_ref, h_ref,
                          init_sem):
    """One grid step == one GraphConv layer; last step also does pool + head.

    x_hbm : [N, P]     bf16, HBM (copied once into h at layer 0)
    adj   : [N, N]     bf16, resident single-buffered (adj[i, j] = w of j -> i)
    wcat  : [1, P, 2P] bf16, streamed per layer ([lin_rel.W^T | lin_root.W^T])
    brel  : [1, 1, P]  f32,  streamed per layer
    pool  : [B, N]     bf16, resident 0/1 one-hot (exact in bf16)
    invc  : [B, 1]     f32,  resident 1/|graph b| reciprocals
    wout  : [P, C]     bf16, resident
    bout  : [1, C]     f32,  resident (padded class columns = -1e30)
    o     : [B, C]     f32 log-probabilities (written on last step only)
    h     : [N, P]     bf16 VMEM scratch, persists across grid steps
    """
    layer = pl.program_id(0)

    @pl.when(layer == 0)
    def _init():
        cp = pltpu.make_async_copy(x_hbm, h_ref, init_sem)
        cp.start()
        cp.wait()

    h = h_ref[...]                                           # bf16 [N, P]
    feat = h.shape[1]
    # GraphConv (aggr="add"): relu( A @ (h @ W_rel) + h @ W_root + b_rel )
    # One 2P-wide MXU call computes both h@W_rel and h@W_root.
    t = jnp.dot(h, wcat_ref[0], preferred_element_type=jnp.float32)  # [N, 2P]
    out = jnp.dot(adj_ref[...], t[:, :feat].astype(jnp.bfloat16),
                  preferred_element_type=jnp.float32)
    out = out + t[:, feat:] + brel_ref[0]
    # NOTE: padded node rows accumulate relu(b_rel) each layer; harmless since
    # adj and pool have zero columns for padded nodes.
    # TODO(synk): F.dropout is identity in eval mode (training=False); no RNG
    # dropout is applied here (inference semantics).
    h_ref[...] = jnp.maximum(out, 0.0).astype(jnp.bfloat16)

    @pl.when(layer == pl.num_programs(0) - 1)
    def _head():
        pooled = jnp.dot(pool_ref[...], h_ref[...],
                         preferred_element_type=jnp.float32)     # [B, P] f32
        pooled = pooled * invc_ref[...]                          # exact mean
        logits = jnp.dot(pooled.astype(jnp.bfloat16), wout_ref[...],
                         preferred_element_type=jnp.float32) + bout_ref[...]
        m = jnp.max(logits, axis=-1, keepdims=True)
        shifted = logits - m
        lse = jnp.log(jnp.sum(jnp.exp(shifted), axis=-1, keepdims=True))
        o_ref[...] = shifted - lse


def _resident_spec(shape):
    """Constant-index BlockSpec, single-buffered if the API supports it."""
    index_map = lambda l, _shape=shape: (0,) * len(_shape)
    try:
        return pl.BlockSpec(shape, index_map, pipeline_mode=pl.Buffered(1))
    except (TypeError, AttributeError):
        return pl.BlockSpec(shape, index_map)


def fused_forward(x_pad, adj, wcat, brel, pool, invc, w_out, b_out):
    num_layers, p, p2 = wcat.shape
    n_pad = adj.shape[0]
    b_pad = pool.shape[0]
    c_pad = w_out.shape[1]

    # VMEM budget: single-buffered residents + double-buffered layer stream +
    # h scratch + f32 matmul temporaries, with headroom; clamp below v7x's
    # 64 MiB physical VMEM per TensorCore.
    resident = (n_pad * n_pad * 2 + b_pad * n_pad * 2 + p * c_pad * 2
                + c_pad * 4 + b_pad * 4 + 2 * b_pad * c_pad * 4)
    streamed = 2 * (p * p2 * 2 + p * 4)
    scratch = n_pad * p * 2 + 3 * n_pad * p * 4
    vmem_limit = int(min(48 * 1024 * 1024,
                         max(2 * (resident + streamed + scratch)
                             + 4 * 1024 * 1024,
                             32 * 1024 * 1024)))

    grid_spec = pltpu.PrefetchScalarGridSpec(
        num_scalar_prefetch=0,
        grid=(num_layers,),
        in_specs=[
            pl.BlockSpec(memory_space=pl.ANY),               # x (HBM, copied once)
            _resident_spec((n_pad, n_pad)),                  # adj
            pl.BlockSpec((1, p, p2), lambda l: (l, 0, 0)),   # wcat[l] (streamed)
            pl.BlockSpec((1, 1, p), lambda l: (l, 0, 0)),    # brel[l] (streamed)
            _resident_spec((b_pad, n_pad)),                  # pool one-hot
            _resident_spec((b_pad, 1)),                      # 1/|graph|
            _resident_spec((p, c_pad)),                      # w_out
            _resident_spec((1, c_pad)),                      # b_out
        ],
        out_specs=pl.BlockSpec((b_pad, c_pad), lambda l: (0, 0)),
        scratch_shapes=[pltpu.VMEM((n_pad, p), jnp.bfloat16),   # resident h
                        pltpu.SemaphoreType.DMA(())],           # x -> h copy
    )
    return pl.pallas_call(
        _fused_forward_kernel,
        out_shape=jax.ShapeDtypeStruct((b_pad, c_pad), jnp.float32),
        grid_spec=grid_spec,
        compiler_params=pltpu.CompilerParams(
            dimension_semantics=("arbitrary",),       # layer axis is sequential
            vmem_limit_bytes=vmem_limit),
    )(x_pad, adj, wcat, brel, pool, invc, w_out, b_out)


# ---------------------------------------------------------------------------
# Plain-JAX glue: densify edge_index / batch, padding, parameter init, forward
# ---------------------------------------------------------------------------

def build_dense_adjacency(edge_index, edge_weights, num_nodes):
    """adj[dst, src] = edge_weight (PyG flow: source_to_target, aggr='add')."""
    src = edge_index[0]
    dst = edge_index[1]
    if edge_weights is None:
        edge_weights = jnp.ones(src.shape[0], dtype=jnp.float32)
    adj = jnp.zeros((num_nodes, num_nodes), dtype=jnp.float32)
    return adj.at[dst, src].add(edge_weights)


def init_params(key, num_features, hidden_layers, num_classes):
    """Deterministic synthetic parameter initialization (weights as [in, out])."""
    params = {"layers": []}
    dims = [num_features] + list(hidden_layers)
    for i in range(len(hidden_layers)):
        fin, fout = dims[i], dims[i + 1]
        key, k1, k2, k3 = jax.random.split(key, 4)
        scale = 1.0 / jnp.sqrt(jnp.float32(fin))
        params["layers"].append({
            "w_rel": jax.random.normal(k1, (fin, fout), jnp.float32) * scale,
            "b_rel": jax.random.normal(k2, (1, fout), jnp.float32) * scale,
            "w_root": jax.random.normal(k3, (fin, fout), jnp.float32) * scale,
        })
    key, k1, k2 = jax.random.split(key, 3)
    h_last = hidden_layers[-1]
    scale = 1.0 / jnp.sqrt(jnp.float32(h_last))
    params["w_out"] = jax.random.normal(k1, (h_last, num_classes),
                                        jnp.float32) * scale
    params["b_out"] = jax.random.normal(k2, (1, num_classes),
                                        jnp.float32) * scale
    return params


@functools.partial(jax.jit, static_argnames=("num_graphs",))
def graphconvnet_g_forward(params, x, edge_index, batch, edge_weights,
                           num_graphs):
    num_nodes, num_features = x.shape
    num_classes = params["w_out"].shape[1]
    hidden_dims = [lyr["w_rel"].shape[1] for lyr in params["layers"]]

    p = _round_up(max([num_features] + hidden_dims), _LANE)   # lane-dense width
    n_pad = _round_up(num_nodes, _LANE)      # lane-dense adj/pool node dim
    b_pad = _round_up(num_graphs, _BF16_SUBLANE)
    c_pad = _round_up(num_classes, _LANE)

    # Dense adjacency (bf16 for the MXU; accumulation is f32 inside the kernel).
    adj = build_dense_adjacency(edge_index, edge_weights, num_nodes)
    adj = _pad2(adj, (n_pad, n_pad)).astype(jnp.bfloat16)
    xp = _pad2(x.astype(jnp.float32), (n_pad, p)).astype(jnp.bfloat16)

    # Per-layer [W_rel | W_root] concatenation -> one MXU call per layer with a
    # 2P-wide output (fills the 256-wide v6e/v7x MXU).
    wcat = jnp.stack([
        jnp.concatenate([_pad2(l["w_rel"], (p, p)),
                         _pad2(l["w_root"], (p, p))], axis=1)
        for l in params["layers"]]).astype(jnp.bfloat16)          # [L, P, 2P]
    brel = jnp.stack([_pad2(l["b_rel"], (1, p)) for l in params["layers"]]
                     ).astype(jnp.float32)                        # [L, 1, P]

    # Exact mean pooling: bf16 0/1 one-hot + f32 per-graph reciprocals.
    onehot = (batch[None, :] == jnp.arange(num_graphs)[:, None]
              ).astype(jnp.float32)                               # [B, N]
    counts = jnp.maximum(onehot.sum(axis=1, keepdims=True), 1.0)
    pool = _pad2(onehot, (b_pad, n_pad)).astype(jnp.bfloat16)
    invc = _pad2(1.0 / counts, (b_pad, 1)).astype(jnp.float32)

    w_out = _pad2(params["w_out"], (p, c_pad)).astype(jnp.bfloat16)
    # Padded class columns get a very negative bias so log_softmax ignores them.
    neg = jnp.full((1, c_pad - num_classes), -1e30, jnp.float32)
    b_out = jnp.concatenate([params["b_out"].astype(jnp.float32), neg], axis=1)

    out = fused_forward(xp, adj, wcat, brel, pool, invc, w_out, b_out)
    return out[:num_graphs, :num_classes]


def reference_forward(params, x, edge_index, batch, edge_weights, num_graphs):
    """Pure-JAX f32 reference (matches the PyTorch module in eval mode)."""
    num_nodes = x.shape[0]
    adj = build_dense_adjacency(edge_index, edge_weights, num_nodes)
    onehot = (batch[None, :] == jnp.arange(num_graphs)[:, None]
              ).astype(jnp.float32)
    counts = jnp.maximum(onehot.sum(axis=1, keepdims=True), 1.0)
    pool = onehot / counts
    h = x.astype(jnp.float32)
    for lyr in params["layers"]:
        h = jnp.maximum(adj @ h @ lyr["w_rel"] + lyr["b_rel"]
                        + h @ lyr["w_root"], 0.0)
    logits = pool @ h @ params["w_out"] + params["b_out"]
    return jax.nn.log_softmax(logits, axis=1)


# ---------------------------------------------------------------------------
# Demo
# ---------------------------------------------------------------------------

if __name__ == "__main__":
    key = jax.random.PRNGKey(0)

    # Small, module-consistent shapes.
    num_nodes = 16            # N  (nodes across the whole batch of graphs)
    num_features = 8          # F  (input node features)
    hidden_layers = [32, 32]  # cfg.model.hidden_layers
    num_classes = 4           # C
    num_graphs = 2            # B
    num_edges = 40            # E

    key, kx, ks, kd, kw = jax.random.split(key, 5)
    x = jax.random.normal(kx, (num_nodes, num_features), jnp.float32)
    src = jax.random.randint(ks, (num_edges,), 0, num_nodes, jnp.int32)
    dst = jax.random.randint(kd, (num_edges,), 0, num_nodes, jnp.int32)
    edge_index = jnp.stack([src, dst], axis=0)                 # [2, E]
    edge_weights = jax.random.uniform(kw, (num_edges,), jnp.float32) + 0.5
    # First half of nodes -> graph 0, second half -> graph 1.
    batch = jnp.concatenate([
        jnp.zeros(num_nodes // 2, jnp.int32),
        jnp.ones(num_nodes - num_nodes // 2, jnp.int32),
    ])

    params = init_params(jax.random.PRNGKey(42), num_features,
                         hidden_layers, num_classes)

    out = graphconvnet_g_forward(params, x, edge_index, batch, edge_weights,
                                 num_graphs)
    out = jax.block_until_ready(out)

    assert out.shape == (num_graphs, num_classes)
    # log_softmax rows should (approximately) exponentiate-sum to 1.
    row_sums = jnp.exp(out).sum(axis=1)
    assert bool(jnp.all(jnp.abs(row_sums - 1.0) < 1e-4))

    # Loose check against the f32 reference (kernel uses bf16 MXU inputs).
    ref = reference_forward(params, x, edge_index, batch, edge_weights,
                            num_graphs)
    prob_diff = jnp.max(jnp.abs(jnp.exp(out) - jnp.exp(ref)))
    assert bool(prob_diff < 0.15)

    print("KERNEL_OK")
</pallas_src>

<mosaic_0001>
module attributes {stable_mosaic.version = 11 : i64} {
  func.func private @main(%arg0: i32) attributes {dimension_semantics = [#tpu.dimension_semantics<core_parallel>], iteration_bounds = array<i64: 2>, tpu.core_type = #tpu.core_type<sc_scalar_subcore>, window_params = []} {
    return
  }
}

module attributes {stable_mosaic.version = 11 : i64} {
  func.func private @main(%arg0: i32) attributes {dimension_semantics = [#tpu.dimension_semantics<core_parallel>], iteration_bounds = array<i64: 2>, tpu.core_type = #tpu.core_type<sc_scalar_subcore>, window_params = []} {
    return
  }
}

module attributes {stable_mosaic.version = 11 : i64} {
  func.func @_fused_forward_kernel(%arg0: i32, %arg1: memref<128x128xbf16, #tpu.memory_space<any>>, %arg2: memref<128x128xbf16, #tpu.memory_space<vmem>>, %arg3: memref<1x128x256xbf16, #tpu.memory_space<vmem>>, %arg4: memref<1x1x128xf32, #tpu.memory_space<vmem>>, %arg5: memref<16x128xbf16, #tpu.memory_space<vmem>>, %arg6: memref<16x1xf32, #tpu.memory_space<vmem>>, %arg7: memref<128x128xbf16, #tpu.memory_space<vmem>>, %arg8: memref<1x128xf32, #tpu.memory_space<vmem>>, %arg9: memref<16x128xf32, #tpu.memory_space<vmem>>, %arg10: memref<128x128xbf16, #tpu.memory_space<vmem>>, %arg11: memref<!tpu.dma_semaphore, #tpu.memory_space<semaphore_mem>>) attributes {dimension_semantics = [#tpu.dimension_semantics<arbitrary>], iteration_bounds = array<i64: 2>, scalar_prefetch = 0 : i64, scratch_operands = 2 : i64, tpu.core_type = #tpu.core_type<tc>, window_params = [{}, {pipeline_mode = #tpu.pipeline_mode<synchronous>, transform_indices = @transform_1, window_bounds = array<i64: 128, 128>}, {transform_indices = @transform_2, window_bounds = array<i64: 1, 128, 256>}, {transform_indices = @transform_3, window_bounds = array<i64: 1, 1, 128>}, {pipeline_mode = #tpu.pipeline_mode<synchronous>, transform_indices = @transform_4, window_bounds = array<i64: 16, 128>}, {pipeline_mode = #tpu.pipeline_mode<synchronous>, transform_indices = @transform_5, window_bounds = array<i64: 16, 1>}, {pipeline_mode = #tpu.pipeline_mode<synchronous>, transform_indices = @transform_6, window_bounds = array<i64: 128, 128>}, {pipeline_mode = #tpu.pipeline_mode<synchronous>, transform_indices = @transform_7, window_bounds = array<i64: 1, 128>}, {pipeline_mode = #tpu.pipeline_mode<synchronous>, transform_indices = @transform_8, window_bounds = array<i64: 16, 128>}]} {
    %c0_i32 = arith.constant 0 : i32
    %0 = arith.cmpi eq, %arg0, %c0_i32 : i32
    %1 = arith.extui %0 : i1 to i32
    %c0_i32_0 = arith.constant 0 : i32
    %2 = arith.cmpi ne, %1, %c0_i32_0 : i32
    scf.if %2 {
      tpu.enqueue_dma source(%arg1 : memref<128x128xbf16, #tpu.memory_space<any>>) target(%arg10 : memref<128x128xbf16, #tpu.memory_space<vmem>>) target_semaphore(%arg11 : memref<!tpu.dma_semaphore, #tpu.memory_space<semaphore_mem>>)
      tpu.wait_dma2 semaphore(%arg11 : memref<!tpu.dma_semaphore, #tpu.memory_space<semaphore_mem>>) src(%arg1 : memref<128x128xbf16, #tpu.memory_space<any>>) dst(%arg10 : memref<128x128xbf16, #tpu.memory_space<vmem>>)
    } else {
    }
    %c0 = arith.constant 0 : index
    %c0_1 = arith.constant 0 : index
    %3 = vector.load %arg10[%c0, %c0_1] : memref<128x128xbf16, #tpu.memory_space<vmem>>, vector<128x128xbf16>
    %c0_2 = arith.constant 0 : index
    %c0_3 = arith.constant 0 : index
    %c0_4 = arith.constant 0 : index
    %4 = vector.load %arg3[%c0_2, %c0_3, %c0_4] : memref<1x128x256xbf16, #tpu.memory_space<vmem>>, vector<1x128x256xbf16>
    %5 = vector.shape_cast %4 : vector<1x128x256xbf16> to vector<128x256xbf16>
    %cst = arith.constant dense<0.000000e+00> : vector<128x256xf32>
    %6 = tpu.matmul %3, %5, %cst {dimension_numbers = #tpu.dot_dimension_numbers<[1], [0], [0], [1], [0, 0, 1, 1], [], []>} : vector<128x128xbf16>, vector<128x256xbf16>, vector<128x256xf32> -> vector<128x256xf32>
    %c0_5 = arith.constant 0 : index
    %c0_6 = arith.constant 0 : index
    %7 = vector.load %arg2[%c0_5, %c0_6] : memref<128x128xbf16, #tpu.memory_space<vmem>>, vector<128x128xbf16>
    %8 = vector.extract_strided_slice %6 {offsets = [0, 0], sizes = [128, 128], strides = [1, 1]} : vector<128x256xf32> to vector<128x128xf32>
    %9 = arith.truncf %8 : vector<128x128xf32> to vector<128x128xbf16>
    %cst_7 = arith.constant dense<0.000000e+00> : vector<128x128xf32>
    %10 = tpu.matmul %7, %9, %cst_7 {dimension_numbers = #tpu.dot_dimension_numbers<[1], [0], [0], [1], [0, 0, 1, 1], [], []>} : vector<128x128xbf16>, vector<128x128xbf16>, vector<128x128xf32> -> vector<128x128xf32>
    %11 = vector.extract_strided_slice %6 {offsets = [0, 128], sizes = [128, 128], strides = [1, 1]} : vector<128x256xf32> to vector<128x128xf32>
    %12 = arith.addf %10, %11 : vector<128x128xf32>
    %c0_8 = arith.constant 0 : index
    %c0_9 = arith.constant 0 : index
    %c0_10 = arith.constant 0 : index
    %13 = vector.load %arg4[%c0_8, %c0_9, %c0_10] : memref<1x1x128xf32, #tpu.memory_space<vmem>>, vector<1x1x128xf32>
    %14 = vector.shape_cast %13 : vector<1x1x128xf32> to vector<1x128xf32>
    %15 = vector.broadcast %14 : vector<1x128xf32> to vector<128x128xf32>
    %16 = arith.addf %12, %15 : vector<128x128xf32>
    %cst_11 = arith.constant 0.000000e+00 : f32
    %17 = vector.broadcast %cst_11 : f32 to vector<128x128xf32>
    %18 = arith.maximumf %16, %17 : vector<128x128xf32>
    %19 = arith.truncf %18 : vector<128x128xf32> to vector<128x128xbf16>
    %c0_12 = arith.constant 0 : index
    %c0_13 = arith.constant 0 : index
    %20 = vector.load %arg10[%c0_12, %c0_13] : memref<128x128xbf16, #tpu.memory_space<vmem>>, vector<128x128xbf16>
    tpu.vector_store %arg10[%c0_12, %c0_13], %19 {strides = array<i32>} : memref<128x128xbf16, #tpu.memory_space<vmem>>, vector<128x128xbf16>,
    %c1_i32 = arith.constant 1 : i32
    %21 = arith.cmpi eq, %arg0, %c1_i32 : i32
    %22 = arith.extui %21 : i1 to i32
    %c0_i32_14 = arith.constant 0 : i32
    %23 = arith.cmpi ne, %22, %c0_i32_14 : i32
    scf.if %23 {
      %c0_15 = arith.constant 0 : index
      %c0_16 = arith.constant 0 : index
      %24 = vector.load %arg5[%c0_15, %c0_16] : memref<16x128xbf16, #tpu.memory_space<vmem>>, vector<16x128xbf16>
      %c0_17 = arith.constant 0 : index
      %c0_18 = arith.constant 0 : index
      %25 = vector.load %arg10[%c0_17, %c0_18] : memref<128x128xbf16, #tpu.memory_space<vmem>>, vector<128x128xbf16>
      %cst_19 = arith.constant dense<0.000000e+00> : vector<16x128xf32>
      %26 = tpu.matmul %24, %25, %cst_19 {dimension_numbers = #tpu.dot_dimension_numbers<[1], [0], [0], [1], [0, 0, 1, 1], [], []>} : vector<16x128xbf16>, vector<128x128xbf16>, vector<16x128xf32> -> vector<16x128xf32>
      %c0_20 = arith.constant 0 : index
      %c0_21 = arith.constant 0 : index
      %27 = vector.load %arg6[%c0_20, %c0_21] : memref<16x1xf32, #tpu.memory_space<vmem>>, vector<16x1xf32>
      %28 = vector.broadcast %27 : vector<16x1xf32> to vector<16x128xf32>
      %29 = arith.mulf %26, %28 : vector<16x128xf32>
      %30 = arith.truncf %29 : vector<16x128xf32> to vector<16x128xbf16>
      %c0_22 = arith.constant 0 : index
      %c0_23 = arith.constant 0 : index
      %31 = vector.load %arg7[%c0_22, %c0_23] : memref<128x128xbf16, #tpu.memory_space<vmem>>, vector<128x128xbf16>
      %cst_24 = arith.constant dense<0.000000e+00> : vector<16x128xf32>
      %32 = tpu.matmul %30, %31, %cst_24 {dimension_numbers = #tpu.dot_dimension_numbers<[1], [0], [0], [1], [0, 0, 1, 1], [], []>} : vector<16x128xbf16>, vector<128x128xbf16>, vector<16x128xf32> -> vector<16x128xf32>
      %c0_25 = arith.constant 0 : index
      %c0_26 = arith.constant 0 : index
      %33 = vector.load %arg8[%c0_25, %c0_26] : memref<1x128xf32, #tpu.memory_space<vmem>>, vector<1x128xf32>
      %34 = vector.broadcast %33 : vector<1x128xf32> to vector<16x128xf32>
      %35 = arith.addf %32, %34 : vector<16x128xf32>
      %cst_27 = arith.constant dense<0xFF800000> : vector<16xf32>
      %36 = vector.multi_reduction <maximumf>, %35, %cst_27 [1] : vector<16x128xf32> to vector<16xf32>
      %37 = vector.shape_cast %36 : vector<16xf32> to vector<16x1xf32>
      %38 = vector.broadcast %37 : vector<16x1xf32> to vector<16x128xf32>
      %39 = arith.subf %35, %38 : vector<16x128xf32>
      %40 = math.exp %39 : vector<16x128xf32>
      %cst_28 = arith.constant dense<0.000000e+00> : vector<16xf32>
      %41 = vector.multi_reduction <add>, %40, %cst_28 [1] : vector<16x128xf32> to vector<16xf32>
      %42 = vector.shape_cast %41 : vector<16xf32> to vector<16x1xf32>
      %43 = math.log %42 : vector<16x1xf32>
      %44 = vector.broadcast %43 : vector<16x1xf32> to vector<16x128xf32>
      %45 = arith.subf %39, %44 : vector<16x128xf32>
      %c0_29 = arith.constant 0 : index
      %c0_30 = arith.constant 0 : index
      %46 = vector.load %arg9[%c0_29, %c0_30] : memref<16x128xf32, #tpu.memory_space<vmem>>, vector<16x128xf32>
      tpu.vector_store %arg9[%c0_29, %c0_30], %45 {strides = array<i32>} : memref<16x128xf32, #tpu.memory_space<vmem>>, vector<16x128xf32>,
    } else {
    }
    return
  }
  func.func @transform_1(%arg0: i32) -> (i32, i32) {
    %c0_i32 = arith.constant 0 : i32
    %c0_i32_0 = arith.constant 0 : i32
    %c0_i32_1 = arith.constant 0 : i32
    return %c0_i32, %c0_i32_0 : i32, i32
  }
  func.func @transform_2(%arg0: i32) -> (i32, i32, i32) {
    %c0_i32 = arith.constant 0 : i32
    %c0_i32_0 = arith.constant 0 : i32
    %c0_i32_1 = arith.constant 0 : i32
    return %arg0, %c0_i32, %c0_i32_0 : i32, i32, i32
  }
  func.func @transform_3(%arg0: i32) -> (i32, i32, i32) {
    %c0_i32 = arith.constant 0 : i32
    %c0_i32_0 = arith.constant 0 : i32
    %c0_i32_1 = arith.constant 0 : i32
    return %arg0, %c0_i32, %c0_i32_0 : i32, i32, i32
  }
  func.func @transform_4(%arg0: i32) -> (i32, i32) {
    %c0_i32 = arith.constant 0 : i32
    %c0_i32_0 = arith.constant 0 : i32
    %c0_i32_1 = arith.constant 0 : i32
    return %c0_i32, %c0_i32_0 : i32, i32
  }
  func.func @transform_5(%arg0: i32) -> (i32, i32) {
    %c0_i32 = arith.constant 0 : i32
    %c0_i32_0 = arith.constant 0 : i32
    %c0_i32_1 = arith.constant 0 : i32
    return %c0_i32, %c0_i32_0 : i32, i32
  }
  func.func @transform_6(%arg0: i32) -> (i32, i32) {
    %c0_i32 = arith.constant 0 : i32
    %c0_i32_0 = arith.constant 0 : i32
    %c0_i32_1 = arith.constant 0 : i32
    return %c0_i32, %c0_i32_0 : i32, i32
  }
  func.func @transform_7(%arg0: i32) -> (i32, i32) {
    %c0_i32 = arith.constant 0 : i32
    %c0_i32_0 = arith.constant 0 : i32
    %c0_i32_1 = arith.constant 0 : i32
    return %c0_i32, %c0_i32_0 : i32, i32
  }
  func.func @transform_8(%arg0: i32) -> (i32, i32) {
    %c0_i32 = arith.constant 0 : i32
    %c0_i32_0 = arith.constant 0 : i32
    %c0_i32_1 = arith.constant 0 : i32
    return %c0_i32, %c0_i32_0 : i32, i32
  }
}

</mosaic_0001>

<llo_original>
// kernel: graphconvnet_g_forward.1
$region0: #{graphconvnet_g_forward.1}
  #allocation0 [shape = 'u32[]', space=smem, size = 0x4, offset = 0x4, fixed_abs, tag = 'smem constant byte address 0x4 - core index']
  #allocation1 [shape = 'u32[144,128]{1,0:T(1,128)}', space=vmem, size = 0x12000, scoped, tag = 'internal scratch']
  #allocation2 [shape = 'bf16[128,128]{1,0:T(8,128)(2,1)}', space=vmem, size = 0x8000, scoped, tag = 'scratch operand']
  #allocation3 [shape = 's32[1]{0}', space=sflag, size = 0x4, scoped, tag = 'scratch operand']
  #allocation4 [shape = 's32[]', space=sflag, size = 0x4, offset = 0, fixed_abs, tag = 'sflag constant byte address 0x0 - dummy sync flag']
  %s0 = inlined_call_operand.vmem [shape: bf16[128,128], index: 0, kind: input, shape index: {}]
  %s1 = inlined_call_operand.vmem [shape: bf16[128,128], index: 1, kind: input, shape index: {}]
  %s2 = inlined_call_operand.vmem [shape: bf16[2,128,256], index: 2, kind: input, shape index: {}]
  %s3 = inlined_call_operand.vmem [shape: f32[2,1,128], index: 3, kind: input, shape index: {}]
  %s4 = inlined_call_operand.vmem [shape: bf16[16,128], index: 4, kind: input, shape index: {}]
  %s5 = inlined_call_operand.vmem [shape: f32[16,1], index: 5, kind: input, shape index: {}]
  %s6 = inlined_call_operand.vmem [shape: bf16[128,128], index: 6, kind: input, shape index: {}]
  %s7 = inlined_call_operand.vmem [shape: f32[1,128], index: 7, kind: input, shape index: {}]
  %s8 = inlined_call_operand.vmem [shape: f32[16,128], index: 8, kind: output, shape index: {}]
  %s9 = sld [smem:[#allocation0]]
  $region103: #{graphconvnet_g_forward.1} parent=0
    _
  %s11 = ssub.s32 1, %s9
  %s12 = scalar_select 0, %s11, %s9
  loop: start=0, step=1, limit=4
  $region2: #{graphconvnet_g_forward.1} parent=0 // loop_pre_header
    _
  $region3: #{graphconvnet_g_forward.1} parent=0 // loop_header
    %s14 = sphi 0, %s18
    %p15 = scmp.ge.s32.totalorder %s14, 4
    %s22 = sphi 0, %s22
    %s24 = sphi 0, %s22
    %s25 = sphi 0, %s24
    %s39 = sphi 0, %s25
    %s45 = sphi 0, %s47
    %s48 = sphi 0, %s45
    %s49 = sphi 0, %s48
    %s65 = sphi 0, %s49
    %s71 = sphi 0, %s73
    %s74 = sphi 0, %s71
    %s75 = sphi 0, %s74
    %s91 = sphi 0, %s75
    %s95 = sphi 0, %s95
    %s97 = sphi 0, %s95
    %s98 = sphi 0, %s97
    %s112 = sphi 0, %s98
    %s116 = sphi 0, %s116
    %s118 = sphi 0, %s116
    %s119 = sphi 0, %s118
    %s133 = sphi 0, %s119
    %s137 = sphi 0, %s137
    %s139 = sphi 0, %s137
    %s140 = sphi 0, %s139
    %s154 = sphi 0, %s140
    %s158 = sphi 0, %s158
    %s160 = sphi 0, %s158
    %s161 = sphi 0, %s160
    %s175 = sphi 0, %s161
    %s179 = sphi 0, %s179
    %s181 = sphi 0, %s179
    %s182 = sphi 0, %s181
    %s196 = sphi 0, %s182
  $region4: #{graphconvnet_g_forward.1} parent=0 // loop_header_branch
    %17 = sbr.rel (%p15) target = $region8
  $region5: #{graphconvnet_g_forward.1} parent=0 // loop_body
    %s19 = ssub.s32 %s14, 1
    %s20 = ssub.s32 %s14, 2
    %s21 = sadd.s32 %s14, 1
    %s23 = sadd.s32 %s22, 1
    %p26 = scmp.eq.s32.totalorder %s14, 1
    %p27 = scmp.ne.s32.totalorder %s22, %s24
    %p28 = scmp.eq.s32.totalorder %s14, 0
    %p29 = por %p27, %p28
    %p30 = scmp.ne.s32.totalorder %s22, %s24
    %p31 = scmp.eq.s32.totalorder %s19, 1
    %p32 = por %p30, %p31
    %p33 = scmp.ne.s32.totalorder %s24, %s25
    %p34 = scmp.eq.s32.totalorder %s19, 0
    %p35 = por %p33, %p34
    %p36 = scmp.ne.s32.totalorder %s24, %s25
    %p37 = scmp.eq.s32.totalorder %s20, 1
    %p38 = por %p36, %p37
    %p40 = scmp.ne.s32.totalorder %s25, %s39
    %p41 = scmp.eq.s32.totalorder %s20, 0
    %p42 = por %p40, %p41
    %s43 = ssub.s32 %s14, %s21
    %p44 = scmp.eq.s32.totalorder %s43, 0
    %s46 = sadd.s32 %s45, 1
    %s47 = scalar_select %p44, %s45, %s46
    %p50 = pneg %p44
    %p51 = scmp.eq.s32.totalorder %s14, 1
    %p52 = por %p50, %p51
    %p53 = scmp.ne.s32.totalorder %s45, %s48
    %p54 = scmp.eq.s32.totalorder %s14, 0
    %p55 = por %p53, %p54
    %p56 = scmp.ne.s32.totalorder %s45, %s48
    %p57 = scmp.eq.s32.totalorder %s19, 1
    %p58 = por %p56, %p57
    %p59 = scmp.ne.s32.totalorder %s48, %s49
    %p60 = scmp.eq.s32.totalorder %s19, 0
    %p61 = por %p59, %p60
    %p62 = scmp.ne.s32.totalorder %s48, %s49
    %p63 = scmp.eq.s32.totalorder %s20, 1
    %p64 = por %p62, %p63
    %p66 = scmp.ne.s32.totalorder %s49, %s65
    %p67 = scmp.eq.s32.totalorder %s20, 0
    %p68 = por %p66, %p67
    %s69 = ssub.s32 %s14, %s21
    %p70 = scmp.eq.s32.totalorder %s69, 0
    %s72 = sadd.s32 %s71, 1
    %s73 = scalar_select %p70, %s71, %s72
    %p76 = pneg %p70
    %p77 = scmp.eq.s32.totalorder %s14, 1
    %p78 = por %p76, %p77
    %p79 = scmp.ne.s32.totalorder %s71, %s74
    %p80 = scmp.eq.s32.totalorder %s14, 0
    %p81 = por %p79, %p80
    %p82 = scmp.ne.s32.totalorder %s71, %s74
    %p83 = scmp.eq.s32.totalorder %s19, 1
    %p84 = por %p82, %p83
    %p85 = scmp.ne.s32.totalorder %s74, %s75
    %p86 = scmp.eq.s32.totalorder %s19, 0
    %p87 = por %p85, %p86
    %p88 = scmp.ne.s32.totalorder %s74, %s75
    %p89 = scmp.eq.s32.totalorder %s20, 1
    %p90 = por %p88, %p89
    %p92 = scmp.ne.s32.totalorder %s75, %s91
    %p93 = scmp.eq.s32.totalorder %s20, 0
    %p94 = por %p92, %p93
    %s96 = sadd.s32 %s95, 1
    %p99 = scmp.eq.s32.totalorder %s14, 1
    %p100 = scmp.ne.s32.totalorder %s95, %s97
    %p101 = scmp.eq.s32.totalorder %s14, 0
    %p102 = por %p100, %p101
    %p103 = scmp.ne.s32.totalorder %s95, %s97
    %p104 = scmp.eq.s32.totalorder %s19, 1
    %p105 = por %p103, %p104
    %p106 = scmp.ne.s32.totalorder %s97, %s98
    %p107 = scmp.eq.s32.totalorder %s19, 0
    %p108 = por %p106, %p107
    %p109 = scmp.ne.s32.totalorder %s97, %s98
    %p110 = scmp.eq.s32.totalorder %s20, 1
    %p111 = por %p109, %p110
    %p113 = scmp.ne.s32.totalorder %s98, %s112
    %p114 = scmp.eq.s32.totalorder %s20, 0
    %p115 = por %p113, %p114
    %s117 = sadd.s32 %s116, 1
    %p120 = scmp.eq.s32.totalorder %s14, 1
    %p121 = scmp.ne.s32.totalorder %s116, %s118
    %p122 = scmp.eq.s32.totalorder %s14, 0
    %p123 = por %p121, %p122
    %p124 = scmp.ne.s32.totalorder %s116, %s118
    %p125 = scmp.eq.s32.totalorder %s19, 1
    %p126 = por %p124, %p125
    %p127 = scmp.ne.s32.totalorder %s118, %s119
    %p128 = scmp.eq.s32.totalorder %s19, 0
    %p129 = por %p127, %p128
    %p130 = scmp.ne.s32.totalorder %s118, %s119
    %p131 = scmp.eq.s32.totalorder %s20, 1
    %p132 = por %p130, %p131
    %p134 = scmp.ne.s32.totalorder %s119, %s133
    %p135 = scmp.eq.s32.totalorder %s20, 0
    %p136 = por %p134, %p135
    %s138 = sadd.s32 %s137, 1
    %p141 = scmp.eq.s32.totalorder %s14, 1
    %p142 = scmp.ne.s32.totalorder %s137, %s139
    %p143 = scmp.eq.s32.totalorder %s14, 0
    %p144 = por %p142, %p143
    %p145 = scmp.ne.s32.totalorder %s137, %s139
    %p146 = scmp.eq.s32.totalorder %s19, 1
    %p147 = por %p145, %p146
    %p148 = scmp.ne.s32.totalorder %s139, %s140
    %p149 = scmp.eq.s32.totalorder %s19, 0
    %p150 = por %p148, %p149
    %p151 = scmp.ne.s32.totalorder %s139, %s140
    %p152 = scmp.eq.s32.totalorder %s20, 1
    %p153 = por %p151, %p152
    %p155 = scmp.ne.s32.totalorder %s140, %s154
    %p156 = scmp.eq.s32.totalorder %s20, 0
    %p157 = por %p155, %p156
    %s159 = sadd.s32 %s158, 1
    %p162 = scmp.eq.s32.totalorder %s14, 1
    %p163 = scmp.ne.s32.totalorder %s158, %s160
    %p164 = scmp.eq.s32.totalorder %s14, 0
    %p165 = por %p163, %p164
    %p166 = scmp.ne.s32.totalorder %s158, %s160
    %p167 = scmp.eq.s32.totalorder %s19, 1
    %p168 = por %p166, %p167
    %p169 = scmp.ne.s32.totalorder %s160, %s161
    %p170 = scmp.eq.s32.totalorder %s19, 0
    %p171 = por %p169, %p170
    %p172 = scmp.ne.s32.totalorder %s160, %s161
    %p173 = scmp.eq.s32.totalorder %s20, 1
    %p174 = por %p172, %p173
    %p176 = scmp.ne.s32.totalorder %s161, %s175
    %p177 = scmp.eq.s32.totalorder %s20, 0
    %p178 = por %p176, %p177
    %s180 = sadd.s32 %s179, 1
    %p183 = scmp.eq.s32.totalorder %s14, 1
    %p184 = scmp.ne.s32.totalorder %s179, %s181
    %p185 = scmp.eq.s32.totalorder %s14, 0
    %p186 = por %p184, %p185
    %p187 = scmp.ne.s32.totalorder %s179, %s181
    %p188 = scmp.eq.s32.totalorder %s19, 1
    %p189 = por %p187, %p188
    %p190 = scmp.ne.s32.totalorder %s181, %s182
    %p191 = scmp.eq.s32.totalorder %s19, 0
    %p192 = por %p190, %p191
    %p193 = scmp.ne.s32.totalorder %s181, %s182
    %p194 = scmp.eq.s32.totalorder %s20, 1
    %p195 = por %p193, %p194
    %p197 = scmp.ne.s32.totalorder %s182, %s196
    %p198 = scmp.eq.s32.totalorder %s20, 0
    %p199 = por %p197, %p198
    %p200 = scmp.le.s32.totalorder 1, %s14
    %p201 = scmp.lt.s32.totalorder %s14, 3
    %p202 = pnand %p200, %p201
    %p203 = pneg %p202
    // Predicated region
    $region9: #{graphconvnet_g_forward.1} parent=5 // pred_check
      _
    $region10: #{graphconvnet_g_forward.1} parent=5 // pred_check_branch
      %205 = sbr.rel (%p202) target = $region12
    $region11: #{graphconvnet_g_forward.1} parent=5 // pred_region
      %s206 = ssub.s32 %s14, 1
      // Predicated region
      $region13: #{graphconvnet_g_forward.1} parent=11 // pred_check
        %p207 = pneg %p35
      $region14: #{graphconvnet_g_forward.1} parent=11 // pred_check_branch
        %209 = sbr.rel (%p207) target = $region16
      $region15: #{graphconvnet_g_forward.1} parent=11 // pred_region
        _
      $region16: #{graphconvnet_g_forward.1} parent=11 // pred_fallthru
        _
      // Predicated region
      $region17: #{graphconvnet_g_forward.1} parent=11 // pred_check
        %p210 = pneg %p108
      $region18: #{graphconvnet_g_forward.1} parent=11 // pred_check_branch
        %212 = sbr.rel (%p210) target = $region20
      $region19: #{graphconvnet_g_forward.1} parent=11 // pred_region
        _
      $region20: #{graphconvnet_g_forward.1} parent=11 // pred_fallthru
        _
      // Predicated region
      $region21: #{graphconvnet_g_forward.1} parent=11 // pred_check
        %p213 = pneg %p129
      $region22: #{graphconvnet_g_forward.1} parent=11 // pred_check_branch
        %215 = sbr.rel (%p213) target = $region24
      $region23: #{graphconvnet_g_forward.1} parent=11 // pred_region
        _
      $region24: #{graphconvnet_g_forward.1} parent=11 // pred_fallthru
        _
      // Predicated region
      $region25: #{graphconvnet_g_forward.1} parent=11 // pred_check
        %p216 = pneg %p150
      $region26: #{graphconvnet_g_forward.1} parent=11 // pred_check_branch
        %218 = sbr.rel (%p216) target = $region28
      $region27: #{graphconvnet_g_forward.1} parent=11 // pred_region
        _
      $region28: #{graphconvnet_g_forward.1} parent=11 // pred_fallthru
        _
      // Predicated region
      $region29: #{graphconvnet_g_forward.1} parent=11 // pred_check
        %p219 = pneg %p171
      $region30: #{graphconvnet_g_forward.1} parent=11 // pred_check_branch
        %221 = sbr.rel (%p219) target = $region32
      $region31: #{graphconvnet_g_forward.1} parent=11 // pred_region
        _
      $region32: #{graphconvnet_g_forward.1} parent=11 // pred_fallthru
        _
    $region12: #{graphconvnet_g_forward.1} parent=5 // pred_fallthru
      _
    %p222 = scmp.lt.s32.totalorder %s14, 2
    // Predicated region
    $region33: #{graphconvnet_g_forward.1} parent=5 // pred_check
      %p223 = pneg %p222
    $region34: #{graphconvnet_g_forward.1} parent=5 // pred_check_branch
      %225 = sbr.rel (%p223) target = $region36
    $region35: #{graphconvnet_g_forward.1} parent=5 // pred_region
      // Predicated region
      $region37: #{graphconvnet_g_forward.1} parent=35 // pred_check
        %p226 = pneg %p55
      $region38: #{graphconvnet_g_forward.1} parent=35 // pred_check_branch
        %228 = sbr.rel (%p226) target = $region40
      $region39: #{graphconvnet_g_forward.1} parent=35 // pred_region
        %p229 = scmp.lt.s32.totalorder %s14, 1
        %s230 = scalar_select %p229, %s14, 1
        %s231 = smul.addr %s230, 32
        %s232 = smul.addr %s231, 4
        %s233 = scalar_lea.vmem %s2, %s232
      $region40: #{graphconvnet_g_forward.1} parent=35 // pred_fallthru
        _
      // Predicated region
      $region41: #{graphconvnet_g_forward.1} parent=35 // pred_check
        %p234 = pneg %p81
      $region42: #{graphconvnet_g_forward.1} parent=35 // pred_check_branch
        %236 = sbr.rel (%p234) target = $region44
      $region43: #{graphconvnet_g_forward.1} parent=35 // pred_region
        %p237 = scmp.lt.s32.totalorder %s14, 1
        %s238 = scalar_select %p237, %s14, 1
        %s239 = scalar_lea.vmem %s3, %s238
      $region44: #{graphconvnet_g_forward.1} parent=35 // pred_fallthru
        _
    $region36: #{graphconvnet_g_forward.1} parent=5 // pred_fallthru
      _
    %p240 = scmp.le.s32.totalorder 1, %s14
    %p241 = scmp.lt.s32.totalorder %s14, 3
    %p242 = pnand %p240, %p241
    %p243 = pneg %p242
    // Predicated region
    $region45: #{graphconvnet_g_forward.1} parent=5 // pred_check
      _
    $region46: #{graphconvnet_g_forward.1} parent=5 // pred_check_branch
      %245 = sbr.rel (%p242) target = $region48
    $region47: #{graphconvnet_g_forward.1} parent=5 // pred_region
      %s246 = ssub.s32 %s14, 1
      %p247 = pneg %p35
      %p248 = pneg %p32
      %p249 = scmp.lt.s32.totalorder %s19, 1
      %s250 = scalar_select %p249, %s19, 1
      %s251 = smul.addr %s250, 32
      %s252 = smul.addr %s251, 4
      %s253 = scalar_lea.vmem %s2, %s252
      %p254 = pneg %p61
      %p255 = pneg %p58
      %p256 = scmp.lt.s32.totalorder %s19, 1
      %s257 = scalar_select %p256, %s19, 1
      %s258 = scalar_lea.vmem %s3, %s257
      %p259 = pneg %p87
      %p260 = pneg %p84
      %p261 = pneg %p108
      %p262 = pneg %p105
      %p263 = pneg %p129
      %p264 = pneg %p126
      %p265 = pneg %p150
      %p266 = pneg %p147
      %p267 = pneg %p171
      %p268 = pneg %p168
      %p269 = pneg %p192
      %p270 = pneg %p189
      %p271 = scmp.lt.s32.totalorder %s19, 1
      %s272 = scalar_select %p271, %s19, 1
      %s273 = smul.addr %s272, 32
      %s274 = smul.addr %s273, 4
      %s275 = scalar_lea.vmem %s2, %s274
      %p276 = scmp.lt.s32.totalorder %s19, 1
      %s277 = scalar_select %p276, %s19, 1
      %s278 = scalar_lea.vmem %s3, %s277
      %p280 = scmp.eq.s32.totalorder %s19, 0
      // Predicated region
      $region49: #{graphconvnet_g_forward.1} parent=47 // pred_check
        %p281 = pneg %p280
      $region50: #{graphconvnet_g_forward.1} parent=47 // pred_check_branch
        %283 = sbr.rel (%p281) target = $region52
      $region51: #{graphconvnet_g_forward.1} parent=47 // pred_region
        %p285 = scmp.lt.u32.totalorder 64, 8
        %p286 = pneg %p285
        // Predicated region
        $region53: #{graphconvnet_g_forward.1} parent=51 // pred_check
          _
        $region54: #{graphconvnet_g_forward.1} parent=51 // pred_check_branch
          %288 = sbr.rel (%p285) target = $region56
        $region55: #{graphconvnet_g_forward.1} parent=51 // pred_region
          %s304 = sand.u32 64, 7
          %p305 = scmp.eq.s32.totalorder %s304, 0
          // Predicated region
          $region68: #{graphconvnet_g_forward.1} parent=55 // pred_check
            %p306 = pneg %p305
          $region69: #{graphconvnet_g_forward.1} parent=55 // pred_check_branch
            %308 = sbr.rel (%p306) target = $region71
          $region70: #{graphconvnet_g_forward.1} parent=55 // pred_region
            loop: start=0, step=1, limit=1
            $region72: #{graphconvnet_g_forward.1} parent=70 // loop_pre_header
              _
            $region73: #{graphconvnet_g_forward.1} parent=70 // loop_header
              %s310 = sphi 0, %s314
              %p311 = scmp.ge.s32.totalorder %s310, 1
              %s315 = sphi %s0, %s0
              %s316 = sphi [#allocation2], [#allocation2]
            $region74: #{graphconvnet_g_forward.1} parent=70 // loop_header_branch
              %313 = sbr.rel (%p311) target = $region78
            $region75: #{graphconvnet_g_forward.1} parent=70 // loop_body
              %v317 = vld [vmem:[%s315] sm:$0xff]
              %318 = vst [vmem:[%s316] sm:$0xff] %v317
              %v319 = vld [vmem:[%s315 + $0x8] sm:$0xff]
              %320 = vst [vmem:[%s316 + $0x8] sm:$0xff] %v319
              %v321 = vld [vmem:[%s315 + $0x10] sm:$0xff]
              %322 = vst [vmem:[%s316 + $0x10] sm:$0xff] %v321
              %v323 = vld [vmem:[%s315 + $0x18] sm:$0xff]
              %324 = vst [vmem:[%s316 + $0x18] sm:$0xff] %v323
              %v325 = vld [vmem:[%s315 + $0x20] sm:$0xff]
              %326 = vst [vmem:[%s316 + $0x20] sm:$0xff] %v325
              %v327 = vld [vmem:[%s315 + $0x28] sm:$0xff]
              %328 = vst [vmem:[%s316 + $0x28] sm:$0xff] %v327
              %v329 = vld [vmem:[%s315 + $0x30] sm:$0xff]
              %330 = vst [vmem:[%s316 + $0x30] sm:$0xff] %v329
              %v331 = vld [vmem:[%s315 + $0x38] sm:$0xff]
              %332 = vst [vmem:[%s316 + $0x38] sm:$0xff] %v331
            $region76: #{graphconvnet_g_forward.1} parent=70 // loop_footer
              %s314 = sadd.s32 1, %s310
            $region77: #{graphconvnet_g_forward.1} parent=70 // loop_footer_branch
              %309 = sbr.rel target = $region73
            $region78: #{graphconvnet_g_forward.1} parent=70 // loop_exit
              _
          $region71: #{graphconvnet_g_forward.1} parent=55 // pred_fallthru
            _
          %p333 = pneg %p305
          // Predicated region
          $region79: #{graphconvnet_g_forward.1} parent=55 // pred_check
            _
          $region80: #{graphconvnet_g_forward.1} parent=55 // pred_check_branch
            %335 = sbr.rel (%p305) target = $region82
          $region81: #{graphconvnet_g_forward.1} parent=55 // pred_region
            %s336 = sand.u32 64, 7
          $region82: #{graphconvnet_g_forward.1} parent=55 // pred_fallthru
            _
        $region56: #{graphconvnet_g_forward.1} parent=51 // pred_fallthru
          _
        // Predicated region
        $region57: #{graphconvnet_g_forward.1} parent=51 // pred_check
          %p289 = pneg %p285
        $region58: #{graphconvnet_g_forward.1} parent=51 // pred_check_branch
          %291 = sbr.rel (%p289) target = $region60
        $region59: #{graphconvnet_g_forward.1} parent=51 // pred_region
          %s292 = sshll.u32 1, 64
          %s293 = ssub.s32 %s292, 1
          loop: start=0, step=1, limit=1
          $region61: #{graphconvnet_g_forward.1} parent=59 // loop_pre_header
            _
          $region62: #{graphconvnet_g_forward.1} parent=59 // loop_header
            %s295 = sphi 0, %s299
            %p296 = scmp.ge.s32.totalorder %s295, 1
            %s300 = sphi %s0, %s0
            %s301 = sphi [#allocation2], [#allocation2]
          $region63: #{graphconvnet_g_forward.1} parent=59 // loop_header_branch
            %298 = sbr.rel (%p296) target = $region67
          $region64: #{graphconvnet_g_forward.1} parent=59 // loop_body
            %v302 = vld [vmem:[%s300] sm:%s293]
            %303 = vst [vmem:[%s301] sm:%s293] %v302
          $region65: #{graphconvnet_g_forward.1} parent=59 // loop_footer
            %s299 = sadd.s32 1, %s295
          $region66: #{graphconvnet_g_forward.1} parent=59 // loop_footer_branch
            %294 = sbr.rel target = $region62
          $region67: #{graphconvnet_g_forward.1} parent=59 // loop_exit
            _
        $region60: #{graphconvnet_g_forward.1} parent=51 // pred_fallthru
          _
        // Predicated region
        $region83: #{graphconvnet_g_forward.1} parent=51 // pred_check
          _
        $region84: #{graphconvnet_g_forward.1} parent=51 // pred_check_branch
          %339 = sbr.rel (0) target = $region86
        $region85: #{graphconvnet_g_forward.1} parent=51 // pred_region
          %340 = vsyncadd [#allocation3], 1024
        $region86: #{graphconvnet_g_forward.1} parent=51 // pred_fallthru
          _
        %s341 = smul.u32 4, 16
        %s342 = smul.u32 %s341, 1
        %s343 = sshll.u32 %s342, 4
        %344 = dma.done [#allocation3], %s343
      $region52: #{graphconvnet_g_forward.1} parent=47 // pred_fallthru
        _
      %v345 = vld [vmem:[#allocation2] sm:$0xf]
      %v346 = vld [vmem:[#allocation2 + $0x4] sm:$0xf]
      %v347 = vld [vmem:[#allocation2 + $0x8] sm:$0xf]
      %v348 = vld [vmem:[#allocation2 + $0xc] sm:$0xf]
      %v349 = vld [vmem:[#allocation2 + $0x10] sm:$0xf]
      %v350 = vld [vmem:[#allocation2 + $0x14] sm:$0xf]
      %v351 = vld [vmem:[#allocation2 + $0x18] sm:$0xf]
      %v352 = vld [vmem:[#allocation2 + $0x1c] sm:$0xf]
      %v353 = vld [vmem:[#allocation2 + $0x20] sm:$0xf]
      %v354 = vld [vmem:[#allocation2 + $0x24] sm:$0xf]
      %v355 = vld [vmem:[#allocation2 + $0x28] sm:$0xf]
      %v356 = vld [vmem:[#allocation2 + $0x2c] sm:$0xf]
      %v357 = vld [vmem:[#allocation2 + $0x30] sm:$0xf]
      %v358 = vld [vmem:[#allocation2 + $0x34] sm:$0xf]
      %v359 = vld [vmem:[#allocation2 + $0x38] sm:$0xf]
      %v360 = vld [vmem:[#allocation2 + $0x3c] sm:$0xf]
      %v361 = vld [vmem:[%s275] sm:$0xff]
      %v362 = vld [vmem:[%s275 + $0x8] sm:$0xff]
      %v363 = vld [vmem:[%s275 + $0x10] sm:$0xff]
      %v364 = vld [vmem:[%s275 + $0x18] sm:$0xff]
      %v365 = vld [vmem:[%s275 + $0x20] sm:$0xff]
      %v366 = vld [vmem:[%s275 + $0x28] sm:$0xff]
      %v367 = vld [vmem:[%s275 + $0x30] sm:$0xff]
      %v368 = vld [vmem:[%s275 + $0x38] sm:$0xff]
      %v369 = vld [vmem:[%s275 + $0x40] sm:$0xff]
      %v370 = vld [vmem:[%s275 + $0x48] sm:$0xff]
      %v371 = vld [vmem:[%s275 + $0x50] sm:$0xff]
      %v372 = vld [vmem:[%s275 + $0x58] sm:$0xff]
      %v373 = vld [vmem:[%s275 + $0x60] sm:$0xff]
      %v374 = vld [vmem:[%s275 + $0x68] sm:$0xff]
      %v375 = vld [vmem:[%s275 + $0x70] sm:$0xff]
      %v376 = vld [vmem:[%s275 + $0x78] sm:$0xff]
      %v393 = vunpack.c.l.b16 %v345
      %v394 = vunpack.c.l.b16 %v346
      %v395 = vunpack.c.l.b16 %v347
      %v396 = vunpack.c.l.b16 %v348
      %v397 = vunpack.c.l.b16 %v349
      %v398 = vunpack.c.l.b16 %v350
      %v399 = vunpack.c.l.b16 %v351
      %v400 = vunpack.c.l.b16 %v352
      %v401 = vunpack.c.l.b16 %v353
      %v402 = vunpack.c.l.b16 %v354
      %v403 = vunpack.c.l.b16 %v355
      %v404 = vunpack.c.l.b16 %v356
      %v405 = vunpack.c.l.b16 %v357
      %v406 = vunpack.c.l.b16 %v358
      %v407 = vunpack.c.l.b16 %v359
      %v408 = vunpack.c.l.b16 %v360
      %v409 = vpack.c.b16 %v394, %v393
      %v410 = vpack.c.b16 %v396, %v395
      %v411 = vpack.c.b16 %v398, %v397
      %v412 = vpack.c.b16 %v400, %v399
      %v413 = vpack.c.b16 %v402, %v401
      %v414 = vpack.c.b16 %v404, %v403
      %v415 = vpack.c.b16 %v406, %v405
      %v416 = vpack.c.b16 %v408, %v407
      %v441 = vunpack.c.l.b16 %v361
      %v442 = vunpack.c.h.b16 %v361
      %v443 = vunpack.c.l.b16 %v362
      %v444 = vunpack.c.h.b16 %v362
      %v445 = vunpack.c.l.b16 %v363
      %v446 = vunpack.c.h.b16 %v363
      %v447 = vunpack.c.l.b16 %v364
      %v448 = vunpack.c.h.b16 %v364
      %v449 = vunpack.c.l.b16 %v365
      %v450 = vunpack.c.h.b16 %v365
      %v451 = vunpack.c.l.b16 %v366
      %v452 = vunpack.c.h.b16 %v366
      %v453 = vunpack.c.l.b16 %v367
      %v454 = vunpack.c.h.b16 %v367
      %v455 = vunpack.c.l.b16 %v368
      %v456 = vunpack.c.h.b16 %v368
      %v457 = vunpack.c.l.b16 %v369
      %v458 = vunpack.c.h.b16 %v369
      %v459 = vunpack.c.l.b16 %v370
      %v460 = vunpack.c.h.b16 %v370
      %v461 = vunpack.c.l.b16 %v371
      %v462 = vunpack.c.h.b16 %v371
      %v463 = vunpack.c.l.b16 %v372
      %v464 = vunpack.c.h.b16 %v372
      %v465 = vunpack.c.l.b16 %v373
      %v466 = vunpack.c.h.b16 %v373
      %v467 = vunpack.c.l.b16 %v374
      %v468 = vunpack.c.h.b16 %v374
      %v469 = vunpack.c.l.b16 %v375
      %v470 = vunpack.c.h.b16 %v375
      %v471 = vunpack.c.l.b16 %v376
      %v472 = vunpack.c.h.b16 %v376
      %v473 = vpack.c.b16 %v443, %v441
      %v474 = vpack.c.b16 %v444, %v442
      %v475 = vpack.c.b16 %v447, %v445
      %v476 = vpack.c.b16 %v448, %v446
      %v477 = vpack.c.b16 %v451, %v449
      %v478 = vpack.c.b16 %v452, %v450
      %v479 = vpack.c.b16 %v455, %v453
      %v480 = vpack.c.b16 %v456, %v454
      %v481 = vpack.c.b16 %v459, %v457
      %v482 = vpack.c.b16 %v460, %v458
      %v483 = vpack.c.b16 %v463, %v461
      %v484 = vpack.c.b16 %v464, %v462
      %v485 = vpack.c.b16 %v467, %v465
      %v486 = vpack.c.b16 %v468, %v466
      %v487 = vpack.c.b16 %v471, %v469
      %v488 = vpack.c.b16 %v472, %v470
      %505 = vmatprep.subr.bf16.mxu0 %v488
      %506 = vmatpush1.bf16.msra.mxu0 %v487
      %507 = vmatprep.subr.bf16.mxu0 %v486
      %508 = vmatpush1.bf16.msra.mxu0 %v485
      %509 = vmatprep.subr.bf16.mxu0 %v484
      %510 = vmatpush1.bf16.msra.mxu0 %v483
      %511 = vmatprep.subr.bf16.mxu0 %v482
      %512 = vmatpush1.bf16.msra.mxu0 %v481
      %513 = vmatprep.subr.bf16.mxu0 %v480
      %514 = vmatpush1.bf16.msra.mxu0 %v479
      %515 = vmatprep.subr.bf16.mxu0 %v478
      %516 = vmatpush1.bf16.msra.mxu0 %v477
      %517 = vmatprep.subr.bf16.mxu0 %v476
      %518 = vmatpush1.bf16.msra.mxu0 %v475
      %519 = vmatprep.subr.bf16.mxu0 %v474
      %520 = vmatpush1.bf16.msra.mxu0 %v473
      %521 = vmatprep.subr.bf16.mxu0 0
      %522 = vmatpush2.bf16.msra.mxu0 0
      %523 = vmatprep.subr.bf16.mxu0 0
      %524 = vmatpush2.bf16.msra.mxu0 0
      %525 = vmatprep.subr.bf16.mxu0 0
      %526 = vmatpush2.bf16.msra.mxu0 0
      %527 = vmatprep.subr.bf16.mxu0 0
      %528 = vmatpush2.bf16.msra.mxu0 0
      %529 = vmatprep.subr.bf16.mxu0 0
      %530 = vmatpush2.bf16.msra.mxu0 0
      %531 = vmatprep.subr.bf16.mxu0 0
      %532 = vmatpush2.bf16.msra.mxu0 0
      %533 = vmatprep.subr.bf16.mxu0 0
      %534 = vmatpush2.bf16.msra.mxu0 0
      %535 = vmatprep.subr.bf16.mxu0 0
      %536 = vmatpush2.bf16.msra.mxu0 0
      %537 = vmatprep.mubr.bf16.mxu0 0
      %538 = vmatmul.mubr.bf16.gmra.mxu0 %v409
      %v539 = vpop.f32.mrf.mxu0
      %v540 = vadd.f32 0.0, %v539
      %v541 = vpop.f32.mrf.mxu0
      %v542 = vadd.f32 0.0, %v541
      %v543 = vpop.f32.mrf.mxu0
      %v544 = vadd.f32 0.0, %v543
      %v545 = vpop.f32.mrf.mxu0
      %v546 = vadd.f32 0.0, %v545
      %547 = vmatprep.mubr.bf16.mxu0 0
      %548 = vmatmul.mubr.bf16.gmra.mxu0 %v410
      %v549 = vpop.f32.mrf.mxu0
      %v550 = vadd.f32 0.0, %v549
      %v551 = vpop.f32.mrf.mxu0
      %v552 = vadd.f32 0.0, %v551
      %v553 = vpop.f32.mrf.mxu0
      %v554 = vadd.f32 0.0, %v553
      %v555 = vpop.f32.mrf.mxu0
      %v556 = vadd.f32 0.0, %v555
      %557 = vmatprep.mubr.bf16.mxu0 0
      %558 = vmatmul.mubr.bf16.gmra.mxu0 %v411
      %v559 = vpop.f32.mrf.mxu0
      %v560 = vadd.f32 0.0, %v559
      %v561 = vpop.f32.mrf.mxu0
      %v562 = vadd.f32 0.0, %v561
      %v563 = vpop.f32.mrf.mxu0
      %v564 = vadd.f32 0.0, %v563
      %v565 = vpop.f32.mrf.mxu0
      %v566 = vadd.f32 0.0, %v565
      %567 = vmatprep.mubr.bf16.mxu0 0
      %568 = vmatmul.mubr.bf16.gmra.mxu0 %v412
      %v569 = vpop.f32.mrf.mxu0
      %v570 = vadd.f32 0.0, %v569
      %v571 = vpop.f32.mrf.mxu0
      %v572 = vadd.f32 0.0, %v571
      %v573 = vpop.f32.mrf.mxu0
      %v574 = vadd.f32 0.0, %v573
      %v575 = vpop.f32.mrf.mxu0
      %v576 = vadd.f32 0.0, %v575
      %577 = vmatprep.mubr.bf16.mxu0 0
      %578 = vmatmul.mubr.bf16.gmra.mxu0 %v413
      %v579 = vpop.f32.mrf.mxu0
      %v580 = vadd.f32 0.0, %v579
      %v581 = vpop.f32.mrf.mxu0
      %v582 = vadd.f32 0.0, %v581
      %v583 = vpop.f32.mrf.mxu0
      %v584 = vadd.f32 0.0, %v583
      %v585 = vpop.f32.mrf.mxu0
      %v586 = vadd.f32 0.0, %v585
      %587 = vmatprep.mubr.bf16.mxu0 0
      %588 = vmatmul.mubr.bf16.gmra.mxu0 %v414
      %v589 = vpop.f32.mrf.mxu0
      %v590 = vadd.f32 0.0, %v589
      %v591 = vpop.f32.mrf.mxu0
      %v592 = vadd.f32 0.0, %v591
      %v593 = vpop.f32.mrf.mxu0
      %v594 = vadd.f32 0.0, %v593
      %v595 = vpop.f32.mrf.mxu0
      %v596 = vadd.f32 0.0, %v595
      %597 = vmatprep.mubr.bf16.mxu0 0
      %598 = vmatmul.mubr.bf16.gmra.mxu0 %v415
      %v599 = vpop.f32.mrf.mxu0
      %v600 = vadd.f32 0.0, %v599
      %v601 = vpop.f32.mrf.mxu0
      %v602 = vadd.f32 0.0, %v601
      %v603 = vpop.f32.mrf.mxu0
      %v604 = vadd.f32 0.0, %v603
      %v605 = vpop.f32.mrf.mxu0
      %v606 = vadd.f32 0.0, %v605
      %607 = vmatprep.mubr.bf16.mxu0 0
      %608 = vmatmul.mubr.bf16.gmra.mxu0 %v416
      %v609 = vpop.f32.mrf.mxu0
      %v610 = vadd.f32 0.0, %v609
      %v611 = vpop.f32.mrf.mxu0
      %v612 = vadd.f32 0.0, %v611
      %v613 = vpop.f32.mrf.mxu0
      %v614 = vadd.f32 0.0, %v613
      %v615 = vpop.f32.mrf.mxu0
      %v616 = vadd.f32 0.0, %v615
      %617 = vdwg.mxu0
      %v618 = vld [vmem:[%s1] sm:$0xf]
      %v619 = vld [vmem:[%s1 + $0x4] sm:$0xf]
      %v620 = vld [vmem:[%s1 + $0x8] sm:$0xf]
      %v621 = vld [vmem:[%s1 + $0xc] sm:$0xf]
      %v622 = vld [vmem:[%s1 + $0x10] sm:$0xf]
      %v623 = vld [vmem:[%s1 + $0x14] sm:$0xf]
      %v624 = vld [vmem:[%s1 + $0x18] sm:$0xf]
      %v625 = vld [vmem:[%s1 + $0x1c] sm:$0xf]
      %v626 = vld [vmem:[%s1 + $0x20] sm:$0xf]
      %v627 = vld [vmem:[%s1 + $0x24] sm:$0xf]
      %v628 = vld [vmem:[%s1 + $0x28] sm:$0xf]
      %v629 = vld [vmem:[%s1 + $0x2c] sm:$0xf]
      %v630 = vld [vmem:[%s1 + $0x30] sm:$0xf]
      %v631 = vld [vmem:[%s1 + $0x34] sm:$0xf]
      %v632 = vld [vmem:[%s1 + $0x38] sm:$0xf]
      %v633 = vld [vmem:[%s1 + $0x3c] sm:$0xf]
      %v634 = vpack.c.bf16 %v544, %v540
      %v635 = vpack.c.bf16 %v554, %v550
      %v636 = vpack.c.bf16 %v564, %v560
      %v637 = vpack.c.bf16 %v574, %v570
      %v638 = vpack.c.bf16 %v584, %v580
      %v639 = vpack.c.bf16 %v594, %v590
      %v640 = vpack.c.bf16 %v604, %v600
      %v641 = vpack.c.bf16 %v614, %v610
      %v658 = vunpack.c.l.b16 %v618
      %v659 = vunpack.c.l.b16 %v619
      %v660 = vunpack.c.l.b16 %v620
      %v661 = vunpack.c.l.b16 %v621
      %v662 = vunpack.c.l.b16 %v622
      %v663 = vunpack.c.l.b16 %v623
      %v664 = vunpack.c.l.b16 %v624
      %v665 = vunpack.c.l.b16 %v625
      %v666 = vunpack.c.l.b16 %v626
      %v667 = vunpack.c.l.b16 %v627
      %v668 = vunpack.c.l.b16 %v628
      %v669 = vunpack.c.l.b16 %v629
      %v670 = vunpack.c.l.b16 %v630
      %v671 = vunpack.c.l.b16 %v631
      %v672 = vunpack.c.l.b16 %v632
      %v673 = vunpack.c.l.b16 %v633
      %v674 = vpack.c.b16 %v659, %v658
      %v675 = vpack.c.b16 %v661, %v660
      %v676 = vpack.c.b16 %v663, %v662
      %v677 = vpack.c.b16 %v665, %v664
      %v678 = vpack.c.b16 %v667, %v666
      %v679 = vpack.c.b16 %v669, %v668
      %v680 = vpack.c.b16 %v671, %v670
      %v681 = vpack.c.b16 %v673, %v672
      %690 = vmatprep.subr.bf16.mxu0 0
      %691 = vmatpush1.bf16.msra.mxu0 %v641
      %692 = vmatprep.subr.bf16.mxu0 0
      %693 = vmatpush1.bf16.msra.mxu0 %v640
      %694 = vmatprep.subr.bf16.mxu0 0
      %695 = vmatpush1.bf16.msra.mxu0 %v639
      %696 = vmatprep.subr.bf16.mxu0 0
      %697 = vmatpush1.bf16.msra.mxu0 %v638
      %698 = vmatprep.subr.bf16.mxu0 0
      %699 = vmatpush1.bf16.msra.mxu0 %v637
      %700 = vmatprep.subr.bf16.mxu0 0
      %701 = vmatpush1.bf16.msra.mxu0 %v636
      %702 = vmatprep.subr.bf16.mxu0 0
      %703 = vmatpush1.bf16.msra.mxu0 %v635
      %704 = vmatprep.subr.bf16.mxu0 0
      %705 = vmatpush1.bf16.msra.mxu0 %v634
      %706 = vmatprep.subr.bf16.mxu0 0
      %707 = vmatpush2.bf16.msra.mxu0 0
      %708 = vmatprep.subr.bf16.mxu0 0
      %709 = vmatpush2.bf16.msra.mxu0 0
      %710 = vmatprep.subr.bf16.mxu0 0
      %711 = vmatpush2.bf16.msra.mxu0 0
      %712 = vmatprep.subr.bf16.mxu0 0
      %713 = vmatpush2.bf16.msra.mxu0 0
      %714 = vmatprep.subr.bf16.mxu0 0
      %715 = vmatpush2.bf16.msra.mxu0 0
      %716 = vmatprep.subr.bf16.mxu0 0
      %717 = vmatpush2.bf16.msra.mxu0 0
      %718 = vmatprep.subr.bf16.mxu0 0
      %719 = vmatpush2.bf16.msra.mxu0 0
      %720 = vmatprep.subr.bf16.mxu0 0
      %721 = vmatpush2.bf16.msra.mxu0 0
      %722 = vmatprep.mubr.bf16.mxu0 0
      %723 = vmatmul.mubr.bf16.gmra.mxu0 %v674
      %v724 = vpop.f32.mrf.mxu0
      %v725 = vadd.f32 %v542, %v724
      %v726 = vpop.f32.mrf.mxu0
      %v727 = vpop.f32.mrf.mxu0
      %v728 = vadd.f32 %v546, %v727
      %v729 = vpop.f32.mrf.mxu0
      %730 = vmatprep.mubr.bf16.mxu0 0
      %731 = vmatmul.mubr.bf16.gmra.mxu0 %v675
      %v732 = vpop.f32.mrf.mxu0
      %v733 = vadd.f32 %v552, %v732
      %v734 = vpop.f32.mrf.mxu0
      %v735 = vpop.f32.mrf.mxu0
      %v736 = vadd.f32 %v556, %v735
      %v737 = vpop.f32.mrf.mxu0
      %738 = vmatprep.mubr.bf16.mxu0 0
      %739 = vmatmul.mubr.bf16.gmra.mxu0 %v676
      %v740 = vpop.f32.mrf.mxu0
      %v741 = vadd.f32 %v562, %v740
      %v742 = vpop.f32.mrf.mxu0
      %v743 = vpop.f32.mrf.mxu0
      %v744 = vadd.f32 %v566, %v743
      %v745 = vpop.f32.mrf.mxu0
      %746 = vmatprep.mubr.bf16.mxu0 0
      %747 = vmatmul.mubr.bf16.gmra.mxu0 %v677
      %v748 = vpop.f32.mrf.mxu0
      %v749 = vadd.f32 %v572, %v748
      %v750 = vpop.f32.mrf.mxu0
      %v751 = vpop.f32.mrf.mxu0
      %v752 = vadd.f32 %v576, %v751
      %v753 = vpop.f32.mrf.mxu0
      %754 = vmatprep.mubr.bf16.mxu0 0
      %755 = vmatmul.mubr.bf16.gmra.mxu0 %v678
      %v756 = vpop.f32.mrf.mxu0
      %v757 = vadd.f32 %v582, %v756
      %v758 = vpop.f32.mrf.mxu0
      %v759 = vpop.f32.mrf.mxu0
      %v760 = vadd.f32 %v586, %v759
      %v761 = vpop.f32.mrf.mxu0
      %762 = vmatprep.mubr.bf16.mxu0 0
      %763 = vmatmul.mubr.bf16.gmra.mxu0 %v679
      %v764 = vpop.f32.mrf.mxu0
      %v765 = vadd.f32 %v592, %v764
      %v766 = vpop.f32.mrf.mxu0
      %v767 = vpop.f32.mrf.mxu0
      %v768 = vadd.f32 %v596, %v767
      %v769 = vpop.f32.mrf.mxu0
      %770 = vmatprep.mubr.bf16.mxu0 0
      %771 = vmatmul.mubr.bf16.gmra.mxu0 %v680
      %v772 = vpop.f32.mrf.mxu0
      %v773 = vadd.f32 %v602, %v772
      %v774 = vpop.f32.mrf.mxu0
      %v775 = vpop.f32.mrf.mxu0
      %v776 = vadd.f32 %v606, %v775
      %v777 = vpop.f32.mrf.mxu0
      %778 = vmatprep.mubr.bf16.mxu0 0
      %779 = vmatmul.mubr.bf16.gmra.mxu0 %v681
      %v780 = vpop.f32.mrf.mxu0
      %v781 = vadd.f32 %v612, %v780
      %v782 = vpop.f32.mrf.mxu0
      %v783 = vpop.f32.mrf.mxu0
      %v784 = vadd.f32 %v616, %v783
      %v785 = vpop.f32.mrf.mxu0
      %786 = vdwg.mxu0
      %v787 = vld [vmem:[%s278] sm:$0x1]
      %v789 = vlaneseq
      %v790 = vshrl.u32 %v789, 7
      %v791 = vsub.s32 0, %v790
      %v792 = vrot.slane %v787, %v791
      %v794 = vadd.f32 %v725, %v792
      %v795 = vadd.f32 %v728, %v792
      %v796 = vadd.f32 %v733, %v792
      %v797 = vadd.f32 %v736, %v792
      %v798 = vadd.f32 %v741, %v792
      %v799 = vadd.f32 %v744, %v792
      %v800 = vadd.f32 %v749, %v792
      %v801 = vadd.f32 %v752, %v792
      %v802 = vadd.f32 %v757, %v792
      %v803 = vadd.f32 %v760, %v792
      %v804 = vadd.f32 %v765, %v792
      %v805 = vadd.f32 %v768, %v792
      %v806 = vadd.f32 %v773, %v792
      %v807 = vadd.f32 %v776, %v792
      %v808 = vadd.f32 %v781, %v792
      %v809 = vadd.f32 %v784, %v792
      %v810 = vmax.f32 %v794, 0.0
      %v811 = vmax.f32 %v795, 0.0
      %v812 = vmax.f32 %v796, 0.0
      %v813 = vmax.f32 %v797, 0.0
      %v814 = vmax.f32 %v798, 0.0
      %v815 = vmax.f32 %v799, 0.0
      %v816 = vmax.f32 %v800, 0.0
      %v817 = vmax.f32 %v801, 0.0
      %v818 = vmax.f32 %v802, 0.0
      %v819 = vmax.f32 %v803, 0.0
      %v820 = vmax.f32 %v804, 0.0
      %v821 = vmax.f32 %v805, 0.0
      %v822 = vmax.f32 %v806, 0.0
      %v823 = vmax.f32 %v807, 0.0
      %v824 = vmax.f32 %v808, 0.0
      %v825 = vmax.f32 %v809, 0.0
      %v826 = vpack.c.bf16 %v811, %v810
      %v827 = vpack.c.bf16 %v813, %v812
      %v828 = vpack.c.bf16 %v815, %v814
      %v829 = vpack.c.bf16 %v817, %v816
      %v830 = vpack.c.bf16 %v819, %v818
      %v831 = vpack.c.bf16 %v821, %v820
      %v832 = vpack.c.bf16 %v823, %v822
      %v833 = vpack.c.bf16 %v825, %v824
      %v842 = vunpack.c.l.b16 %v826
      %v843 = vunpack.c.h.b16 %v826
      %v844 = vunpack.c.l.b16 %v827
      %v845 = vunpack.c.h.b16 %v827
      %v846 = vunpack.c.l.b16 %v828
      %v847 = vunpack.c.h.b16 %v828
      %v848 = vunpack.c.l.b16 %v829
      %v849 = vunpack.c.h.b16 %v829
      %v850 = vunpack.c.l.b16 %v830
      %v851 = vunpack.c.h.b16 %v830
      %v852 = vunpack.c.l.b16 %v831
      %v853 = vunpack.c.h.b16 %v831
      %v854 = vunpack.c.l.b16 %v832
      %v855 = vunpack.c.h.b16 %v832
      %v856 = vunpack.c.l.b16 %v833
      %v857 = vunpack.c.h.b16 %v833
      %v858 = vpack.c.b16 %v842, %v842
      %v859 = vpack.c.b16 %v843, %v843
      %v860 = vpack.c.b16 %v844, %v844
      %v861 = vpack.c.b16 %v845, %v845
      %v862 = vpack.c.b16 %v846, %v846
      %v863 = vpack.c.b16 %v847, %v847
      %v864 = vpack.c.b16 %v848, %v848
      %v865 = vpack.c.b16 %v849, %v849
      %v866 = vpack.c.b16 %v850, %v850
      %v867 = vpack.c.b16 %v851, %v851
      %v868 = vpack.c.b16 %v852, %v852
      %v869 = vpack.c.b16 %v853, %v853
      %v870 = vpack.c.b16 %v854, %v854
      %v871 = vpack.c.b16 %v855, %v855
      %v872 = vpack.c.b16 %v856, %v856
      %v873 = vpack.c.b16 %v857, %v857
      %890 = vst [vmem:[#allocation2] sm:$0xf] %v858
      %891 = vst [vmem:[#allocation2 + $0x4] sm:$0xf] %v859
      %892 = vst [vmem:[#allocation2 + $0x8] sm:$0xf] %v860
      %893 = vst [vmem:[#allocation2 + $0xc] sm:$0xf] %v861
      %894 = vst [vmem:[#allocation2 + $0x10] sm:$0xf] %v862
      %895 = vst [vmem:[#allocation2 + $0x14] sm:$0xf] %v863
      %896 = vst [vmem:[#allocation2 + $0x18] sm:$0xf] %v864
      %897 = vst [vmem:[#allocation2 + $0x1c] sm:$0xf] %v865
      %898 = vst [vmem:[#allocation2 + $0x20] sm:$0xf] %v866
      %899 = vst [vmem:[#allocation2 + $0x24] sm:$0xf] %v867
      %900 = vst [vmem:[#allocation2 + $0x28] sm:$0xf] %v868
      %901 = vst [vmem:[#allocation2 + $0x2c] sm:$0xf] %v869
      %902 = vst [vmem:[#allocation2 + $0x30] sm:$0xf] %v870
      %903 = vst [vmem:[#allocation2 + $0x34] sm:$0xf] %v871
      %904 = vst [vmem:[#allocation2 + $0x38] sm:$0xf] %v872
      %905 = vst [vmem:[#allocation2 + $0x3c] sm:$0xf] %v873
      %p906 = scmp.eq.s32.totalorder %s19, 1
      // Predicated region
      $region87: #{graphconvnet_g_forward.1} parent=47 // pred_check
        %p907 = pneg %p906
      $region88: #{graphconvnet_g_forward.1} parent=47 // pred_check_branch
        %909 = sbr.rel (%p907) target = $region90
      $region89: #{graphconvnet_g_forward.1} parent=47 // pred_region
        %v910 = vld [vmem:[%s4] sm:$0xf]
        %v911 = vld [vmem:[%s4 + $0x4] sm:$0xf]
        %v912 = vld [vmem:[#allocation2] sm:$0xf]
        %v913 = vld [vmem:[#allocation2 + $0x4] sm:$0xf]
        %v914 = vld [vmem:[#allocation2 + $0x8] sm:$0xf]
        %v915 = vld [vmem:[#allocation2 + $0xc] sm:$0xf]
        %v916 = vld [vmem:[#allocation2 + $0x10] sm:$0xf]
        %v917 = vld [vmem:[#allocation2 + $0x14] sm:$0xf]
        %v918 = vld [vmem:[#allocation2 + $0x18] sm:$0xf]
        %v919 = vld [vmem:[#allocation2 + $0x1c] sm:$0xf]
        %v920 = vld [vmem:[#allocation2 + $0x20] sm:$0xf]
        %v921 = vld [vmem:[#allocation2 + $0x24] sm:$0xf]
        %v922 = vld [vmem:[#allocation2 + $0x28] sm:$0xf]
        %v923 = vld [vmem:[#allocation2 + $0x2c] sm:$0xf]
        %v924 = vld [vmem:[#allocation2 + $0x30] sm:$0xf]
        %v925 = vld [vmem:[#allocation2 + $0x34] sm:$0xf]
        %v926 = vld [vmem:[#allocation2 + $0x38] sm:$0xf]
        %v927 = vld [vmem:[#allocation2 + $0x3c] sm:$0xf]
        %v930 = vunpack.c.l.b16 %v910
        %v931 = vunpack.c.l.b16 %v911
        %v932 = vpack.c.b16 %v931, %v930
        %v950 = vunpack.c.l.b16 %v912
        %v951 = vunpack.c.l.b16 %v913
        %v952 = vunpack.c.l.b16 %v914
        %v953 = vunpack.c.l.b16 %v915
        %v954 = vunpack.c.l.b16 %v916
        %v955 = vunpack.c.l.b16 %v917
        %v956 = vunpack.c.l.b16 %v918
        %v957 = vunpack.c.l.b16 %v919
        %v958 = vunpack.c.l.b16 %v920
        %v959 = vunpack.c.l.b16 %v921
        %v960 = vunpack.c.l.b16 %v922
        %v961 = vunpack.c.l.b16 %v923
        %v962 = vunpack.c.l.b16 %v924
        %v963 = vunpack.c.l.b16 %v925
        %v964 = vunpack.c.l.b16 %v926
        %v965 = vunpack.c.l.b16 %v927
        %v966 = vpack.c.b16 %v951, %v950
        %v967 = vpack.c.b16 %v953, %v952
        %v968 = vpack.c.b16 %v955, %v954
        %v969 = vpack.c.b16 %v957, %v956
        %v970 = vpack.c.b16 %v959, %v958
        %v971 = vpack.c.b16 %v961, %v960
        %v972 = vpack.c.b16 %v963, %v962
        %v973 = vpack.c.b16 %v965, %v964
        %982 = vmatprep.subr.bf16.mxu0 0
        %983 = vmatpush1.bf16.msra.mxu0 %v973
        %984 = vmatprep.subr.bf16.mxu0 0
        %985 = vmatpush1.bf16.msra.mxu0 %v972
        %986 = vmatprep.subr.bf16.mxu0 0
        %987 = vmatpush1.bf16.msra.mxu0 %v971
        %988 = vmatprep.subr.bf16.mxu0 0
        %989 = vmatpush1.bf16.msra.mxu0 %v970
        %990 = vmatprep.subr.bf16.mxu0 0
        %991 = vmatpush1.bf16.msra.mxu0 %v969
        %992 = vmatprep.subr.bf16.mxu0 0
        %993 = vmatpush1.bf16.msra.mxu0 %v968
        %994 = vmatprep.subr.bf16.mxu0 0
        %995 = vmatpush1.bf16.msra.mxu0 %v967
        %996 = vmatprep.subr.bf16.mxu0 0
        %997 = vmatpush1.bf16.msra.mxu0 %v966
        %998 = vmatprep.subr.bf16.mxu0 0
        %999 = vmatpush2.bf16.msra.mxu0 0
        %1000 = vmatprep.subr.bf16.mxu0 0
        %1001 = vmatpush2.bf16.msra.mxu0 0
        %1002 = vmatprep.subr.bf16.mxu0 0
        %1003 = vmatpush2.bf16.msra.mxu0 0
        %1004 = vmatprep.subr.bf16.mxu0 0
        %1005 = vmatpush2.bf16.msra.mxu0 0
        %1006 = vmatprep.subr.bf16.mxu0 0
        %1007 = vmatpush2.bf16.msra.mxu0 0
        %1008 = vmatprep.subr.bf16.mxu0 0
        %1009 = vmatpush2.bf16.msra.mxu0 0
        %1010 = vmatprep.subr.bf16.mxu0 0
        %1011 = vmatpush2.bf16.msra.mxu0 0
        %1012 = vmatprep.subr.bf16.mxu0 0
        %1013 = vmatpush2.bf16.msra.mxu0 0
        %1014 = vmatprep.mubr.bf16.mxu0 0
        %1015 = vmatmul.mubr.bf16.gmra.mxu0 %v932
        %v1016 = vpop.f32.mrf.mxu0
        %v1017 = vadd.f32 0.0, %v1016
        %v1018 = vpop.f32.mrf.mxu0
        %v1019 = vpop.f32.mrf.mxu0
        %v1020 = vadd.f32 0.0, %v1019
        %v1021 = vpop.f32.mrf.mxu0
        %1022 = vdwg.mxu0
        %v1023 = vld [vmem:[%s5] sm:$0xff]
        %v1024 = vld [vmem:[%s5 + $0x8] sm:$0xff]
        %1026 = vset.pattern.permute.xlu0 0
        %1027 = vperm.xlu0 %1026, %v1023
        %v1028 = vpop.permute.xlu0 %1027
        %1031 = vset.pattern.permute.xlu0 0
        %1032 = vperm.xlu0 %1031, %v1024
        %v1033 = vpop.permute.xlu0 %1032
        %v1035 = vmul.f32 %v1017, %v1028
        %v1036 = vmul.f32 %v1020, %v1033
        %v1037 = vpack.c.bf16 %v1036, %v1035
        %v1038 = vld [vmem:[%s6] sm:$0xf]
        %v1039 = vld [vmem:[%s6 + $0x4] sm:$0xf]
        %v1040 = vld [vmem:[%s6 + $0x8] sm:$0xf]
        %v1041 = vld [vmem:[%s6 + $0xc] sm:$0xf]
        %v1042 = vld [vmem:[%s6 + $0x10] sm:$0xf]
        %v1043 = vld [vmem:[%s6 + $0x14] sm:$0xf]
        %v1044 = vld [vmem:[%s6 + $0x18] sm:$0xf]
        %v1045 = vld [vmem:[%s6 + $0x1c] sm:$0xf]
        %v1046 = vld [vmem:[%s6 + $0x20] sm:$0xf]
        %v1047 = vld [vmem:[%s6 + $0x24] sm:$0xf]
        %v1048 = vld [vmem:[%s6 + $0x28] sm:$0xf]
        %v1049 = vld [vmem:[%s6 + $0x2c] sm:$0xf]
        %v1050 = vld [vmem:[%s6 + $0x30] sm:$0xf]
        %v1051 = vld [vmem:[%s6 + $0x34] sm:$0xf]
        %v1052 = vld [vmem:[%s6 + $0x38] sm:$0xf]
        %v1053 = vld [vmem:[%s6 + $0x3c] sm:$0xf]
        %v1054 = vld [vmem:[%s7] sm:$0x1]
        %v1056 = vlaneseq
        %v1057 = vshrl.u32 %v1056, 7
        %v1058 = vsub.s32 0, %v1057
        %v1059 = vrot.slane %v1054, %v1058
        %v1077 = vunpack.c.l.b16 %v1038
        %v1078 = vunpack.c.l.b16 %v1039
        %v1079 = vunpack.c.l.b16 %v1040
        %v1080 = vunpack.c.l.b16 %v1041
        %v1081 = vunpack.c.l.b16 %v1042
        %v1082 = vunpack.c.l.b16 %v1043
        %v1083 = vunpack.c.l.b16 %v1044
        %v1084 = vunpack.c.l.b16 %v1045
        %v1085 = vunpack.c.l.b16 %v1046
        %v1086 = vunpack.c.l.b16 %v1047
        %v1087 = vunpack.c.l.b16 %v1048
        %v1088 = vunpack.c.l.b16 %v1049
        %v1089 = vunpack.c.l.b16 %v1050
        %v1090 = vunpack.c.l.b16 %v1051
        %v1091 = vunpack.c.l.b16 %v1052
        %v1092 = vunpack.c.l.b16 %v1053
        %v1093 = vpack.c.b16 %v1078, %v1077
        %v1094 = vpack.c.b16 %v1080, %v1079
        %v1095 = vpack.c.b16 %v1082, %v1081
        %v1096 = vpack.c.b16 %v1084, %v1083
        %v1097 = vpack.c.b16 %v1086, %v1085
        %v1098 = vpack.c.b16 %v1088, %v1087
        %v1099 = vpack.c.b16 %v1090, %v1089
        %v1100 = vpack.c.b16 %v1092, %v1091
        %1109 = vmatprep.subr.bf16.mxu0 0
        %1110 = vmatpush1.bf16.msra.mxu0 %v1100
        %1111 = vmatprep.subr.bf16.mxu0 0
        %1112 = vmatpush1.bf16.msra.mxu0 %v1099
        %1113 = vmatprep.subr.bf16.mxu0 0
        %1114 = vmatpush1.bf16.msra.mxu0 %v1098
        %1115 = vmatprep.subr.bf16.mxu0 0
        %1116 = vmatpush1.bf16.msra.mxu0 %v1097
        %1117 = vmatprep.subr.bf16.mxu0 0
        %1118 = vmatpush1.bf16.msra.mxu0 %v1096
        %1119 = vmatprep.subr.bf16.mxu0 0
        %1120 = vmatpush1.bf16.msra.mxu0 %v1095
        %1121 = vmatprep.subr.bf16.mxu0 0
        %1122 = vmatpush1.bf16.msra.mxu0 %v1094
        %1123 = vmatprep.subr.bf16.mxu0 0
        %1124 = vmatpush1.bf16.msra.mxu0 %v1093
        %1125 = vmatprep.subr.bf16.mxu0 0
        %1126 = vmatpush2.bf16.msra.mxu0 0
        %1127 = vmatprep.subr.bf16.mxu0 0
        %1128 = vmatpush2.bf16.msra.mxu0 0
        %1129 = vmatprep.subr.bf16.mxu0 0
        %1130 = vmatpush2.bf16.msra.mxu0 0
        %1131 = vmatprep.subr.bf16.mxu0 0
        %1132 = vmatpush2.bf16.msra.mxu0 0
        %1133 = vmatprep.subr.bf16.mxu0 0
        %1134 = vmatpush2.bf16.msra.mxu0 0
        %1135 = vmatprep.subr.bf16.mxu0 0
        %1136 = vmatpush2.bf16.msra.mxu0 0
        %1137 = vmatprep.subr.bf16.mxu0 0
        %1138 = vmatpush2.bf16.msra.mxu0 0
        %1139 = vmatprep.subr.bf16.mxu0 0
        %1140 = vmatpush2.bf16.msra.mxu0 0
        %1141 = vmatprep.mubr.bf16.mxu0 0
        %1142 = vmatmul.mubr.bf16.gmra.mxu0 %v1037
        %v1143 = vpop.f32.mrf.mxu0
        %v1144 = vadd.f32 %v1059, %v1143
        %v1145 = vpop.f32.mrf.mxu0
        %v1146 = vpop.f32.mrf.mxu0
        %v1147 = vadd.f32 %v1059, %v1146
        %v1148 = vpop.f32.mrf.mxu0
        %1149 = vdwg.mxu0
        %1150 = vmax.xlane.f32.xlu0 %v1144
        %v1151 = vpop.xlane.xlu0 %1150
        %1152 = vmax.xlane.f32.xlu0 %v1147
        %v1153 = vpop.xlane.xlu0 %1152
        %v1154 = vsub.f32 %v1144, %v1151
        %v1155 = vsub.f32 %v1147, %v1153
        %v1156 = vmul.f32 %v1154, 1.442695
        %v1157 = vpow.pop %v1156
        %v1158 = vmul.f32 %v1155, 1.442695
        %v1159 = vpow.pop %v1158
        %1160 = vadd.xlane.f32.xlu0 %v1157
        %v1161 = vpop.xlane.xlu0 %1160
        %1162 = vadd.xlane.f32.xlu0 %v1159
        %v1163 = vpop.xlane.xlu0 %1162
        %v1164 = vlog2.pop %v1161
        %v1165 = vmul.f32 %v1164, 0.6931472
        %v1166 = vlog2.pop %v1163
        %v1167 = vmul.f32 %v1166, 0.6931472
        %v1168 = vsub.f32 %v1154, %v1165
        %v1169 = vsub.f32 %v1155, %v1167
        %1170 = vst [vmem:[%s8] sm:$0xff] %v1168
        %1171 = vst [vmem:[%s8 + $0x8] sm:$0xff] %v1169
      $region90: #{graphconvnet_g_forward.1} parent=47 // pred_fallthru
        _
      // Predicated region
      $region91: #{graphconvnet_g_forward.1} parent=47 // pred_check
        %p1172 = pneg %p189
      $region92: #{graphconvnet_g_forward.1} parent=47 // pred_check_branch
        %1174 = sbr.rel (%p1172) target = $region94
      $region93: #{graphconvnet_g_forward.1} parent=47 // pred_region
        _
      $region94: #{graphconvnet_g_forward.1} parent=47 // pred_fallthru
        _
      // Predicated region
      $region95: #{graphconvnet_g_forward.1} parent=47 // pred_check
        %p1175 = pneg %p189
      $region96: #{graphconvnet_g_forward.1} parent=47 // pred_check_branch
        %1177 = sbr.rel (%p1175) target = $region98
      $region97: #{graphconvnet_g_forward.1} parent=47 // pred_region
        _
      $region98: #{graphconvnet_g_forward.1} parent=47 // pred_fallthru
        _
    $region48: #{graphconvnet_g_forward.1} parent=5 // pred_fallthru
      _
    %p1178 = scmp.le.s32.totalorder 2, %s14
    // Predicated region
    $region99: #{graphconvnet_g_forward.1} parent=5 // pred_check
      %p1179 = pneg %p1178
    $region100: #{graphconvnet_g_forward.1} parent=5 // pred_check_branch
      %1181 = sbr.rel (%p1179) target = $region102
    $region101: #{graphconvnet_g_forward.1} parent=5 // pred_region
      %s1182 = ssub.s32 %s14, 2
    $region102: #{graphconvnet_g_forward.1} parent=5 // pred_fallthru
      _
  $region6: #{graphconvnet_g_forward.1} parent=0 // loop_footer
    %s18 = sadd.s32 1, %s14
  $region7: #{graphconvnet_g_forward.1} parent=0 // loop_footer_branch
    %13 = sbr.rel target = $region3
  $region8: #{graphconvnet_g_forward.1} parent=0 // loop_exit
    _
  %1183 = vsyncmov [#allocation3]
  %s1184 = vpop.sfrf %1183
  %p1185 = scmp.eq.s32.totalorder %s1184, 0
  %p1186 = pneg %p1185
  %1188 = shalt.err (%p1186)

</llo_original>
